<compile_context>
chip_gen: v6e
topology: v6e:2x2x1
jax: 0.10.0
libtpu: 0.0.40
codegen_flags: <defaults>
</compile_context>

<pallas_src>
import math

import jax
import jax.numpy as jnp
from jax.experimental import pallas as pl
from jax.experimental.pallas import tpu as pltpu


def _copy_kernel(x_ref, o_ref):
    # Pure copy on a lane-dense tile; flattening already happened (for free)
    # in the wrapper via a metadata-only reshape. Real fused work would go here.
    o_ref[...] = x_ref[...]


def _sublane_multiple(dtype):
    # f32 -> 8, bf16 -> 16, int8/fp8 -> 32 (native sublane packing).
    itemsize = jnp.dtype(dtype).itemsize
    return max(8, 32 // max(1, itemsize))


def _choose_tiles(N, F, itemsize, sub, target_bytes):
    """Pick (tb, tf) so each pipeline buffer is <= target_bytes and lane/sublane
    aligned (or spans the full dimension)."""
    total_bytes = N * F * itemsize
    if total_bytes <= target_bytes:
        # Whole array in one block.
        return N, F

    row_bytes = F * itemsize
    if row_bytes * sub <= target_bytes:
        # Full rows fit; batch `sub`-aligned groups of rows per block.
        rows_fit = target_bytes // row_bytes
        tb = (rows_fit // sub) * sub
        tb = max(sub, tb)
        tb = min(tb, N)
        # total_bytes > target_bytes guarantees tb < N here -> >= 2 row blocks
        # (keeps both v7x TensorCores busy on the "parallel" row axis).
        return tb, F

    # Rows are large: tile the feature axis in 128-multiples, keep a small
    # (sublane-aligned or full-batch) row tile.
    tb = N if N <= sub else sub
    tf_budget = target_bytes // max(1, tb * itemsize)
    tf = max(128, (tf_budget // 128) * 128)
    if tf >= F:
        tf = F  # full dim is always legal
    return tb, tf


def flatten_pallas(x):
    """torch.flatten(x, 1) materialized through a Pallas copy kernel.

    Only useful as a fusion site — on its own the plain reshape (see
    `flatten`) is strictly better since flatten is metadata-only.
    """
    N = x.shape[0]
    F = math.prod(x.shape[1:]) if x.ndim > 1 else 1

    # Free, metadata-only reshape in XLA — zero HBM traffic.
    x2 = x.reshape(N, F)

    itemsize = jnp.dtype(x.dtype).itemsize
    sub = _sublane_multiple(x.dtype)
    target_bytes = 2 << 20  # ~2 MiB/buffer; 4 pipeline buffers ~ 8 MiB << every scoped VMEM limit

    tb, tf = _choose_tiles(N, F, itemsize, sub, target_bytes)
    grid = (pl.cdiv(N, tb), pl.cdiv(F, tf))

    return pl.pallas_call(
        _copy_kernel,
        out_shape=jax.ShapeDtypeStruct((N, F), x.dtype),
        grid_spec=pltpu.PrefetchScalarGridSpec(
            num_scalar_prefetch=0,
            grid=grid,
            in_specs=[pl.BlockSpec((tb, tf), lambda i, j: (i, j))],
            out_specs=pl.BlockSpec((tb, tf), lambda i, j: (i, j)),
        ),
        compiler_params=pltpu.CompilerParams(
            dimension_semantics=("parallel", "parallel"),
            vmem_limit_bytes=32 << 20,
        ),
    )(x2)


def flatten(x, use_kernel=False):
    """Equivalent of torch.flatten(x, 1).

    Default path is the zero-cost metadata reshape (the correct implementation
    of Flatten). Pass use_kernel=True only when fusing real work into the
    Pallas kernel.
    """
    if not use_kernel:
        N = x.shape[0]
        F = math.prod(x.shape[1:]) if x.ndim > 1 else 1
        return x.reshape(N, F)
    return flatten_pallas(x)


if __name__ == "__main__":
    key = jax.random.PRNGKey(0)
    # Small shapes consistent with the module's forward (NCHW).
    x = jax.random.normal(key, (2, 4, 16, 16), dtype=jnp.float32)

    # Exercise the Pallas kernel path once.
    out_kernel = flatten(x, use_kernel=True)
    jax.block_until_ready(out_kernel)

    # Default (recommended) path: free reshape.
    out_fast = flatten(x)
    jax.block_until_ready(out_fast)

    # Correctness checks against plain JAX reshape (== torch.flatten(x, 1)).
    ref = x.reshape(x.shape[0], -1)
    assert out_kernel.shape == (2, 4 * 16 * 16), out_kernel.shape
    assert out_fast.shape == (2, 4 * 16 * 16), out_fast.shape
    assert jnp.array_equal(out_kernel, ref), "kernel mismatch vs reference flatten"
    assert jnp.array_equal(out_fast, ref), "fast path mismatch vs reference flatten"

    print("KERNEL_OK")
</pallas_src>

<mosaic_0001>
module attributes {stable_mosaic.version = 11 : i64} {
  func.func @_copy_kernel(%arg0: i32, %arg1: i32, %arg2: memref<2x1024xf32, #tpu.memory_space<vmem>>, %arg3: memref<2x1024xf32, #tpu.memory_space<vmem>>) attributes {dimension_semantics = [#tpu.dimension_semantics<parallel>, #tpu.dimension_semantics<parallel>], iteration_bounds = array<i64: 1, 1>, scalar_prefetch = 0 : i64, scratch_operands = 0 : i64, tpu.core_type = #tpu.core_type<tc>, window_params = [{transform_indices = @transform_0, window_bounds = array<i64: 2, 1024>}, {transform_indices = @transform_1, window_bounds = array<i64: 2, 1024>}]} {
    %c0 = arith.constant 0 : index
    %c0_0 = arith.constant 0 : index
    %0 = vector.load %arg2[%c0, %c0_0] : memref<2x1024xf32, #tpu.memory_space<vmem>>, vector<2x1024xf32>
    %c0_1 = arith.constant 0 : index
    %c0_2 = arith.constant 0 : index
    %1 = vector.load %arg3[%c0_1, %c0_2] : memref<2x1024xf32, #tpu.memory_space<vmem>>, vector<2x1024xf32>
    tpu.vector_store %arg3[%c0_1, %c0_2], %0 {strides = array<i32>} : memref<2x1024xf32, #tpu.memory_space<vmem>>, vector<2x1024xf32>,
    return
  }
  func.func @transform_0(%arg0: i32, %arg1: i32) -> (i32, i32) {
    %c0_i32 = arith.constant 0 : i32
    return %arg0, %arg1 : i32, i32
  }
  func.func @transform_1(%arg0: i32, %arg1: i32) -> (i32, i32) {
    %c0_i32 = arith.constant 0 : i32
    return %arg0, %arg1 : i32, i32
  }
}

</mosaic_0001>

<llo_original>
// kernel: tpu_custom_call.1
$region0: #{tpu_custom_call.1}
  #allocation0 [shape = 'u32[]', space=smem, size = 0x4, offset = 0x4, fixed_abs, tag = 'smem constant byte address 0x4 - core index']
  #allocation1 [shape = 'u32[144,128]{1,0:T(1,128)}', space=vmem, size = 0x12000, scoped, tag = 'internal scratch']
  %s0 = inlined_call_operand.hbm [shape: f32[2,1024], index: 0, kind: input, shape index: {}]
  %s1 = inlined_call_operand.hbm [shape: f32[2,1024], index: 1, kind: output, shape index: {}]
  %s2 = sld [smem:[#allocation0]]
  $region18: #{tpu_custom_call.1} parent=0
    _
  %s4 = ssub.s32 1, %s2
  %s5 = scalar_select 0, %s4, %s2
  $region1: #{tpu_custom_call.1} parent=0
    #allocation2 [shape = 'u8[8192]{0}', space=vmem, size = 0x2000, scoped, tag = 'input window, operand 0, single buffered']
    #allocation3 [shape = 's32[1]{0}', space=sflag, size = 0x4, scoped, tag = 'scoped memory for tpu_custom_call.1']
    #allocation4 [shape = 's32[1]{0}', space=sflag, size = 0x4, scoped, tag = 'scoped memory for tpu_custom_call.1']
    #allocation5 [shape = 'u8[8192]{0}', space=vmem, size = 0x2000, scoped, tag = 'output window, operand 0, single buffered']
    %6 = vsyncpa [#allocation3], 0
    %7 = vsyncpa [#allocation4], 0
    // Predicated region
    $region2: #{tpu_custom_call.1} parent=1 // pred_check
      _
    $region3: #{tpu_custom_call.1} parent=1 // pred_check_branch
      %9 = sbr.rel (0) target = $region5
    $region4: #{tpu_custom_call.1} parent=1 // pred_region
      %s11 = ssub.s32 256, 256
      %12 = vsyncadd [#allocation3], %s11
      %s14 = sshll.u32 [#allocation2], 4
      %s15 = int_to_ptr.vmem [resolvable:$true] %s14
      %17 = dma.hbm_to_vmem [thread:$0]  %s0, 256, %s15, [#allocation3]
    $region5: #{tpu_custom_call.1} parent=1 // pred_fallthru
      _
    // Predicated region
    $region6: #{tpu_custom_call.1} parent=1 // pred_check
      _
    $region7: #{tpu_custom_call.1} parent=1 // pred_check_branch
      %19 = sbr.rel (0) target = $region9
    $region8: #{tpu_custom_call.1} parent=1 // pred_region
      %20 = dma.done [#allocation3], 256
    $region9: #{tpu_custom_call.1} parent=1 // pred_fallthru
      _
    %v21 = vld [vmem:[#allocation2] sm:$0xff]
    %v22 = vld [vmem:[#allocation2 + $0x8] sm:$0xff]
    %23 = vst [vmem:[#allocation5] sm:$0xff] %v21
    %24 = vst [vmem:[#allocation5 + $0x8] sm:$0xff] %v22
    // Predicated region
    $region10: #{tpu_custom_call.1} parent=1 // pred_check
      _
    $region11: #{tpu_custom_call.1} parent=1 // pred_check_branch
      %26 = sbr.rel (0) target = $region13
    $region12: #{tpu_custom_call.1} parent=1 // pred_region
      %s28 = ssub.s32 256, 256
      %29 = vsyncadd [#allocation4], %s28
      %s31 = sshll.u32 [#allocation5], 4
      %s32 = int_to_ptr.vmem [resolvable:$true] %s31
      %34 = dma.vmem_to_hbm [thread:$0]  %s32, 256, %s1, [#allocation4]
    $region13: #{tpu_custom_call.1} parent=1 // pred_fallthru
      _
    // Predicated region
    $region14: #{tpu_custom_call.1} parent=1 // pred_check
      _
    $region15: #{tpu_custom_call.1} parent=1 // pred_check_branch
      %36 = sbr.rel (0) target = $region17
    $region16: #{tpu_custom_call.1} parent=1 // pred_region
      %37 = dma.done [#allocation4], 256
    $region17: #{tpu_custom_call.1} parent=1 // pred_fallthru
      _
    %38 = vsyncpa [#allocation3], 1
    %39 = vsyncpa [#allocation4], 1

</llo_original>
